<compile_context>
chip_gen: v5e
topology: v5e:2x2
jax: 0.10.0
libtpu: 0.0.40
codegen_flags: <defaults>
</compile_context>

<pallas_src>
import jax
import jax.numpy as jnp
from jax import lax
from jax.experimental import pallas as pl
from jax.experimental.pallas import tpu as pltpu  # noqa: F401  (not needed at this size)

# ---------------- small, deterministic "config" ----------------
VOCAB = 100            # text vocab size
HIDDEN = 32            # vilt_hidden_size
MAX_POS = 16           # max_position_embeddings
TYPE_VOCAB = 2         # type_vocab_size (text token types)
MODALITY_VOCAB = 2     # modality_type_vocab_size
IMG = 16               # image size
PATCH = 4              # patch size
CHANNELS = 4           # num_channels
LN_EPS = 1e-12

B = 2                  # batch
T = 8                  # text sequence length
NPATCH = (IMG // PATCH) ** 2      # 16
S_IMG = NPATCH + 1                # 17 = CLS + patches
S_ALL = T + S_IMG                 # 25 = text + image rows
CP2 = CHANNELS * PATCH * PATCH    # 64 = flattened patch features


# ---------------- fused Pallas kernel ----------------
def _fused_embeddings_kernel(word_ref, type_ref, pos_ref, gamma_ref, beta_ref,
                             tt0_ref, patch_ref, w_ref, cls_ref, padd_ref,
                             out_ref):
    # word/type: (B, T, H)   pos: (T, H)   gamma/beta/tt0/cls: (1, H)
    # patch: (B*NPATCH, CP2) w: (CP2, H)   padd: (NPATCH, H)
    # out: (B, T + S_IMG, H)

    # ---- text (BERT-style): add -> LayerNorm -> + modality_type_emb[0] ----
    x = word_ref[...] + type_ref[...] + pos_ref[...]                 # (B, T, H)
    mean = jnp.mean(x, axis=-1, keepdims=True)
    var = jnp.mean(x * x, axis=-1, keepdims=True) - mean * mean      # one-pass var, f32
    xn = (x - mean) * lax.rsqrt(var + LN_EPS)
    out_ref[:, 0:T, :] = xn * gamma_ref[...] + beta_ref[...] + tt0_ref[...]

    # ---- image (ViT-style): folded patch matmul on the MXU ----
    # TODO(synk): at real ViLT dims (CP2~3072, H=768) cast matmul operands to
    # bf16 (keep f32 accumulation) and tile with K last in the grid.
    mm = jnp.dot(patch_ref[...], w_ref[...],
                 preferred_element_type=jnp.float32)                 # (B*NPATCH, H)
    # CLS row: cls_token + vit_pos[0] + modality_type_emb[1], precomputed.
    out_ref[:, T:T + 1, :] = jnp.broadcast_to(cls_ref[...][None], (B, 1, HIDDEN))
    # Patch rows: + (conv_bias + vit_pos[1:] + modality_type_emb[1]).
    out_ref[:, T + 1:, :] = mm.reshape(B, NPATCH, HIDDEN) + padd_ref[...][None]


def _fused_embeddings_pallas(word_g, type_g, pos_e, gamma, beta, tt0,
                             patches, w_mat, cls_add, patch_add):
    # No grid: every operand is a single whole-array VMEM block (a few KiB total),
    # one kernel launch, output written already concatenated.
    return pl.pallas_call(
        _fused_embeddings_kernel,
        out_shape=jax.ShapeDtypeStruct((B, S_ALL, HIDDEN), jnp.float32),
    )(word_g, type_g, pos_e, gamma, beta, tt0, patches, w_mat, cls_add, patch_add)


# ---------------- plain-JAX helpers (glue / rare paths / reference) ----------------
def _text_embeds_jax(params, input_ids, token_type_ids, inputs_embeds=None):
    word = params["word_emb"][input_ids] if inputs_embeds is None else inputs_embeds
    x = word + params["text_type_emb"][token_type_ids] + params["text_pos_emb"][:T][None]
    mean = x.mean(-1, keepdims=True)
    var = ((x - mean) ** 2).mean(-1, keepdims=True)
    y = (x - mean) / jnp.sqrt(var + LN_EPS) * params["ln_gamma"] + params["ln_beta"]
    return y + params["modality_emb"][0]


# ---------------- forward (mirrors ViltEmbeddings.forward) ----------------
def vilt_embeddings_forward(params, input_ids, attention_mask, token_type_ids,
                            pixel_values, pixel_mask=None, inputs_embeds=None,
                            image_embeds=None, image_token_type_idx=1):
    if image_token_type_idx is None:
        image_token_type_idx = 1

    if image_embeds is None:
        # ---- text glue: embedding-table gathers (stay in XLA) ----
        # TODO(synk): embedding gathers are left to XLA; an in-kernel gather would
        # need a DMA-gather and is not worthwhile at these table sizes.
        word_g = (params["word_emb"][input_ids] if inputs_embeds is None
                  else inputs_embeds)                                  # (B, T, H)
        type_g = params["text_type_emb"][token_type_ids]               # (B, T, H)
        pos_e = params["text_pos_emb"][:T]                             # (T, H)
        gamma = params["ln_gamma"][None]                               # (1, H)
        beta = params["ln_beta"][None]                                 # (1, H)
        tt0 = params["modality_emb"][0][None]                          # (1, H)

        # ---- image glue: im2col (stride == kernel conv), batch folded into rows ----
        x = pixel_values.reshape(B, CHANNELS, IMG // PATCH, PATCH, IMG // PATCH, PATCH)
        patches = x.transpose(0, 2, 4, 1, 3, 5).reshape(B * NPATCH, CP2)   # (32, 64)
        w_mat = params["conv_w"].reshape(HIDDEN, CP2).T                    # (64, 32)

        tt1 = params["modality_emb"][image_token_type_idx]                 # (H,)
        pos_img = params["vit_pos_emb"][0]                                 # (S_IMG, H)
        cls_add = (params["cls_token"][0, 0] + pos_img[0] + tt1)[None]     # (1, H)
        patch_add = params["conv_b"][None] + pos_img[1:] + tt1[None]       # (NPATCH, H)

        embeddings = _fused_embeddings_pallas(
            word_g, type_g, pos_e, gamma, beta, tt0,
            patches, w_mat, cls_add, patch_add)                            # (B, 25, H)
        image_masks = jnp.ones((B, S_IMG), dtype=attention_mask.dtype)
    else:
        # Rare path: caller supplied image_embeds; keep it in plain JAX.
        text_embeds = _text_embeds_jax(params, input_ids, token_type_ids, inputs_embeds)
        image_embeds = image_embeds + params["modality_emb"][image_token_type_idx]
        image_masks = jnp.ones(image_embeds.shape[:2], dtype=attention_mask.dtype)
        embeddings = jnp.concatenate([text_embeds, image_embeds], axis=1)

    masks = jnp.concatenate([attention_mask, image_masks], axis=1)         # (B, T+S_IMG)
    return embeddings, masks


# ---------------- pure-JAX reference for a correctness check ----------------
def _reference_forward(params, input_ids, attention_mask, token_type_ids, pixel_values):
    text = _text_embeds_jax(params, input_ids, token_type_ids)

    conv = lax.conv_general_dilated(
        pixel_values, params["conv_w"], window_strides=(PATCH, PATCH),
        padding="VALID", dimension_numbers=("NCHW", "OIHW", "NCHW"))
    conv = conv + params["conv_b"][None, :, None, None]
    patches = conv.reshape(B, HIDDEN, NPATCH).transpose(0, 2, 1)
    cls = jnp.broadcast_to(params["cls_token"], (B, 1, HIDDEN))
    img = jnp.concatenate([cls, patches], axis=1) + params["vit_pos_emb"]
    img = img + params["modality_emb"][1]

    emb = jnp.concatenate([text, img], axis=1)
    masks = jnp.concatenate(
        [attention_mask, jnp.ones((B, S_IMG), attention_mask.dtype)], axis=1)
    return emb, masks


if __name__ == "__main__":
    key = jax.random.PRNGKey(0)
    ks = jax.random.split(key, 10)
    n = lambda k, s: 0.02 * jax.random.normal(k, s, dtype=jnp.float32)

    params = {
        "word_emb": n(ks[0], (VOCAB, HIDDEN)),
        "text_pos_emb": n(ks[1], (MAX_POS, HIDDEN)),
        "text_type_emb": n(ks[2], (TYPE_VOCAB, HIDDEN)),
        "ln_gamma": jnp.ones((HIDDEN,), jnp.float32),
        "ln_beta": jnp.zeros((HIDDEN,), jnp.float32),
        "cls_token": n(ks[3], (1, 1, HIDDEN)),
        "conv_w": n(ks[4], (HIDDEN, CHANNELS, PATCH, PATCH)),   # OIHW like nn.Conv2d
        "conv_b": n(ks[5], (HIDDEN,)),
        "vit_pos_emb": n(ks[6], (1, S_IMG, HIDDEN)),
        "modality_emb": n(ks[7], (MODALITY_VOCAB, HIDDEN)),
    }

    input_ids = jax.random.randint(ks[8], (B, T), 0, VOCAB)
    attention_mask = jnp.ones((B, T), dtype=jnp.int32)
    token_type_ids = jnp.zeros((B, T), dtype=jnp.int32)
    pixel_values = jax.random.normal(ks[9], (B, CHANNELS, IMG, IMG), dtype=jnp.float32)

    embeddings, masks = vilt_embeddings_forward(
        params, input_ids, attention_mask, token_type_ids, pixel_values)
    embeddings = jax.block_until_ready(embeddings)
    masks = jax.block_until_ready(masks)

    ref_emb, ref_masks = _reference_forward(
        params, input_ids, attention_mask, token_type_ids, pixel_values)

    assert embeddings.shape == (B, T + S_IMG, HIDDEN)
    assert masks.shape == (B, T + S_IMG)
    assert jnp.allclose(embeddings, ref_emb, atol=1e-4, rtol=1e-4)
    assert jnp.array_equal(masks, ref_masks)

    print("KERNEL_OK")
</pallas_src>

<mosaic_0001>
module attributes {stable_mosaic.version = 11 : i64} {
  func.func @_fused_embeddings_kernel(%arg0: memref<2x8x32xf32, #tpu.memory_space<vmem>>, %arg1: memref<2x8x32xf32, #tpu.memory_space<vmem>>, %arg2: memref<8x32xf32, #tpu.memory_space<vmem>>, %arg3: memref<1x32xf32, #tpu.memory_space<vmem>>, %arg4: memref<1x32xf32, #tpu.memory_space<vmem>>, %arg5: memref<1x32xf32, #tpu.memory_space<vmem>>, %arg6: memref<32x64xf32, #tpu.memory_space<vmem>>, %arg7: memref<64x32xf32, #tpu.memory_space<vmem>>, %arg8: memref<1x32xf32, #tpu.memory_space<vmem>>, %arg9: memref<16x32xf32, #tpu.memory_space<vmem>>, %arg10: memref<2x25x32xf32, #tpu.memory_space<vmem>>) attributes {dimension_semantics = [], scalar_prefetch = 0 : i64, scratch_operands = 0 : i64, tpu.core_type = #tpu.core_type<tc>} {
    %c0 = arith.constant 0 : index
    %c0_0 = arith.constant 0 : index
    %c0_1 = arith.constant 0 : index
    %0 = vector.load %arg0[%c0, %c0_0, %c0_1] : memref<2x8x32xf32, #tpu.memory_space<vmem>>, vector<2x8x32xf32>
    %c0_2 = arith.constant 0 : index
    %c0_3 = arith.constant 0 : index
    %c0_4 = arith.constant 0 : index
    %1 = vector.load %arg1[%c0_2, %c0_3, %c0_4] : memref<2x8x32xf32, #tpu.memory_space<vmem>>, vector<2x8x32xf32>
    %2 = arith.addf %0, %1 : vector<2x8x32xf32>
    %c0_5 = arith.constant 0 : index
    %c0_6 = arith.constant 0 : index
    %3 = vector.load %arg2[%c0_5, %c0_6] : memref<8x32xf32, #tpu.memory_space<vmem>>, vector<8x32xf32>
    %4 = vector.shape_cast %3 : vector<8x32xf32> to vector<1x8x32xf32>
    %5 = vector.broadcast %4 : vector<1x8x32xf32> to vector<2x8x32xf32>
    %6 = arith.addf %2, %5 : vector<2x8x32xf32>
    %cst = arith.constant dense<0.000000e+00> : vector<2x8xf32>
    %7 = vector.multi_reduction <add>, %6, %cst [2] : vector<2x8x32xf32> to vector<2x8xf32>
    %8 = vector.shape_cast %7 : vector<2x8xf32> to vector<2x8x1xf32>
    %cst_7 = arith.constant 3.200000e+01 : f32
    %9 = vector.broadcast %cst_7 : f32 to vector<2x8x1xf32>
    %10 = arith.divf %8, %9 : vector<2x8x1xf32>
    %11 = arith.mulf %6, %6 : vector<2x8x32xf32>
    %cst_8 = arith.constant dense<0.000000e+00> : vector<2x8xf32>
    %12 = vector.multi_reduction <add>, %11, %cst_8 [2] : vector<2x8x32xf32> to vector<2x8xf32>
    %13 = vector.shape_cast %12 : vector<2x8xf32> to vector<2x8x1xf32>
    %cst_9 = arith.constant 3.200000e+01 : f32
    %14 = vector.broadcast %cst_9 : f32 to vector<2x8x1xf32>
    %15 = arith.divf %13, %14 : vector<2x8x1xf32>
    %16 = arith.mulf %10, %10 : vector<2x8x1xf32>
    %17 = arith.subf %15, %16 : vector<2x8x1xf32>
    %18 = vector.broadcast %10 : vector<2x8x1xf32> to vector<2x8x32xf32>
    %19 = arith.subf %6, %18 : vector<2x8x32xf32>
    %cst_10 = arith.constant 9.99999996E-13 : f32
    %20 = vector.broadcast %cst_10 : f32 to vector<2x8x1xf32>
    %21 = arith.addf %17, %20 : vector<2x8x1xf32>
    %22 = math.rsqrt %21 : vector<2x8x1xf32>
    %23 = vector.broadcast %22 : vector<2x8x1xf32> to vector<2x8x32xf32>
    %24 = arith.mulf %19, %23 : vector<2x8x32xf32>
    %c0_11 = arith.constant 0 : index
    %c0_12 = arith.constant 0 : index
    %25 = vector.load %arg3[%c0_11, %c0_12] : memref<1x32xf32, #tpu.memory_space<vmem>>, vector<1x32xf32>
    %26 = vector.shape_cast %25 : vector<1x32xf32> to vector<1x1x32xf32>
    %27 = vector.broadcast %26 : vector<1x1x32xf32> to vector<2x8x32xf32>
    %28 = arith.mulf %24, %27 : vector<2x8x32xf32>
    %c0_13 = arith.constant 0 : index
    %c0_14 = arith.constant 0 : index
    %29 = vector.load %arg4[%c0_13, %c0_14] : memref<1x32xf32, #tpu.memory_space<vmem>>, vector<1x32xf32>
    %30 = vector.shape_cast %29 : vector<1x32xf32> to vector<1x1x32xf32>
    %31 = vector.broadcast %30 : vector<1x1x32xf32> to vector<2x8x32xf32>
    %32 = arith.addf %28, %31 : vector<2x8x32xf32>
    %c0_15 = arith.constant 0 : index
    %c0_16 = arith.constant 0 : index
    %33 = vector.load %arg5[%c0_15, %c0_16] : memref<1x32xf32, #tpu.memory_space<vmem>>, vector<1x32xf32>
    %34 = vector.shape_cast %33 : vector<1x32xf32> to vector<1x1x32xf32>
    %35 = vector.broadcast %34 : vector<1x1x32xf32> to vector<2x8x32xf32>
    %36 = arith.addf %32, %35 : vector<2x8x32xf32>
    %c0_17 = arith.constant 0 : index
    %c0_18 = arith.constant 0 : index
    %c0_19 = arith.constant 0 : index
    %37 = vector.load %arg10[%c0_17, %c0_18, %c0_19] : memref<2x25x32xf32, #tpu.memory_space<vmem>>, vector<2x8x32xf32>
    tpu.vector_store %arg10[%c0_17, %c0_18, %c0_19], %36 {strides = array<i32>} : memref<2x25x32xf32, #tpu.memory_space<vmem>>, vector<2x8x32xf32>,
    %c0_20 = arith.constant 0 : index
    %c0_21 = arith.constant 0 : index
    %38 = vector.load %arg6[%c0_20, %c0_21] : memref<32x64xf32, #tpu.memory_space<vmem>>, vector<32x64xf32>
    %c0_22 = arith.constant 0 : index
    %c0_23 = arith.constant 0 : index
    %39 = vector.load %arg7[%c0_22, %c0_23] : memref<64x32xf32, #tpu.memory_space<vmem>>, vector<64x32xf32>
    %cst_24 = arith.constant dense<0.000000e+00> : vector<32x32xf32>
    %40 = tpu.matmul %38, %39, %cst_24 {dimension_numbers = #tpu.dot_dimension_numbers<[1], [0], [0], [1], [0, 0, 1, 1], [], []>} : vector<32x64xf32>, vector<64x32xf32>, vector<32x32xf32> -> vector<32x32xf32>
    %c0_25 = arith.constant 0 : index
    %c0_26 = arith.constant 0 : index
    %41 = vector.load %arg8[%c0_25, %c0_26] : memref<1x32xf32, #tpu.memory_space<vmem>>, vector<1x32xf32>
    %42 = vector.shape_cast %41 : vector<1x32xf32> to vector<1x1x32xf32>
    %43 = vector.shape_cast %42 : vector<1x1x32xf32> to vector<1x1x32xf32>
    %44 = vector.broadcast %43 : vector<1x1x32xf32> to vector<2x1x32xf32>
    %c0_27 = arith.constant 0 : index
    %c8 = arith.constant 8 : index
    %c0_28 = arith.constant 0 : index
    %45 = vector.load %arg10[%c0_27, %c8, %c0_28] : memref<2x25x32xf32, #tpu.memory_space<vmem>>, vector<2x1x32xf32>
    tpu.vector_store %arg10[%c0_27, %c8, %c0_28], %44 {strides = array<i32>} : memref<2x25x32xf32, #tpu.memory_space<vmem>>, vector<2x1x32xf32>,
    %46 = vector.shape_cast %40 : vector<32x32xf32> to vector<2x16x32xf32>
    %c0_29 = arith.constant 0 : index
    %c0_30 = arith.constant 0 : index
    %47 = vector.load %arg9[%c0_29, %c0_30] : memref<16x32xf32, #tpu.memory_space<vmem>>, vector<16x32xf32>
    %48 = vector.shape_cast %47 : vector<16x32xf32> to vector<1x16x32xf32>
    %49 = vector.broadcast %48 : vector<1x16x32xf32> to vector<2x16x32xf32>
    %50 = arith.addf %46, %49 : vector<2x16x32xf32>
    %c0_31 = arith.constant 0 : index
    %c9 = arith.constant 9 : index
    %c0_32 = arith.constant 0 : index
    %51 = vector.load %arg10[%c0_31, %c9, %c0_32] : memref<2x25x32xf32, #tpu.memory_space<vmem>>, vector<2x16x32xf32>
    tpu.vector_store %arg10[%c0_31, %c9, %c0_32], %50 {strides = array<i32>} : memref<2x25x32xf32, #tpu.memory_space<vmem>>, vector<2x16x32xf32>,
    return
  }
}

</mosaic_0001>

<llo_original>
// kernel: tpu_custom_call.1
$region0: #{tpu_custom_call.1}
  #allocation0 [shape = 'u32[]', space=smem, size = 0x4, offset = 0x4, fixed_abs, tag = 'smem constant byte address 0x4 - core index']
  #allocation1 [shape = 'u32[72,128]{1,0:T(1,128)}', space=vmem, size = 0x9000, scoped, tag = 'internal scratch']
  %s0 = inlined_call_operand.vmem [shape: f32[2,8,32], index: 0, kind: input, shape index: {}]
  %s1 = inlined_call_operand.vmem [shape: f32[2,8,32], index: 1, kind: input, shape index: {}]
  %s2 = inlined_call_operand.vmem [shape: f32[8,32], index: 2, kind: input, shape index: {}]
  %s3 = inlined_call_operand.vmem [shape: f32[1,32], index: 3, kind: input, shape index: {}]
  %s4 = inlined_call_operand.vmem [shape: f32[1,32], index: 4, kind: input, shape index: {}]
  %s5 = inlined_call_operand.vmem [shape: f32[1,32], index: 5, kind: input, shape index: {}]
  %s6 = inlined_call_operand.vmem [shape: f32[32,64], index: 6, kind: input, shape index: {}]
  %s7 = inlined_call_operand.vmem [shape: f32[64,32], index: 7, kind: input, shape index: {}]
  %s8 = inlined_call_operand.vmem [shape: f32[1,32], index: 8, kind: input, shape index: {}]
  %s9 = inlined_call_operand.vmem [shape: f32[16,32], index: 9, kind: input, shape index: {}]
  %s10 = inlined_call_operand.vmem [shape: f32[2,25,32], index: 10, kind: output, shape index: {}]
  %s11 = sld [smem:[#allocation0]]
  $region50: #{tpu_custom_call.1} parent=0
    _
  %s13 = ssub.s32 1, %s11
  %s14 = scalar_select 0, %s13, %s11
  // Predicated region
  $region2: #{tpu_custom_call.1} parent=0 // pred_check
    _
  $region3: #{tpu_custom_call.1} parent=0 // pred_check_branch
    %16 = sbr.rel (0) target = $region5
  $region4: #{tpu_custom_call.1} parent=0 // pred_region
    _
  $region5: #{tpu_custom_call.1} parent=0 // pred_fallthru
    _
  // Predicated region
  $region6: #{tpu_custom_call.1} parent=0 // pred_check
    _
  $region7: #{tpu_custom_call.1} parent=0 // pred_check_branch
    %18 = sbr.rel (0) target = $region9
  $region8: #{tpu_custom_call.1} parent=0 // pred_region
    _
  $region9: #{tpu_custom_call.1} parent=0 // pred_fallthru
    _
  // Predicated region
  $region10: #{tpu_custom_call.1} parent=0 // pred_check
    _
  $region11: #{tpu_custom_call.1} parent=0 // pred_check_branch
    %20 = sbr.rel (0) target = $region13
  $region12: #{tpu_custom_call.1} parent=0 // pred_region
    _
  $region13: #{tpu_custom_call.1} parent=0 // pred_fallthru
    _
  // Predicated region
  $region14: #{tpu_custom_call.1} parent=0 // pred_check
    _
  $region15: #{tpu_custom_call.1} parent=0 // pred_check_branch
    %22 = sbr.rel (0) target = $region17
  $region16: #{tpu_custom_call.1} parent=0 // pred_region
    _
  $region17: #{tpu_custom_call.1} parent=0 // pred_fallthru
    _
  // Predicated region
  $region18: #{tpu_custom_call.1} parent=0 // pred_check
    _
  $region19: #{tpu_custom_call.1} parent=0 // pred_check_branch
    %24 = sbr.rel (0) target = $region21
  $region20: #{tpu_custom_call.1} parent=0 // pred_region
    _
  $region21: #{tpu_custom_call.1} parent=0 // pred_fallthru
    _
  // Predicated region
  $region22: #{tpu_custom_call.1} parent=0 // pred_check
    _
  $region23: #{tpu_custom_call.1} parent=0 // pred_check_branch
    %26 = sbr.rel (0) target = $region25
  $region24: #{tpu_custom_call.1} parent=0 // pred_region
    _
  $region25: #{tpu_custom_call.1} parent=0 // pred_fallthru
    _
  // Predicated region
  $region26: #{tpu_custom_call.1} parent=0 // pred_check
    _
  $region27: #{tpu_custom_call.1} parent=0 // pred_check_branch
    %28 = sbr.rel (0) target = $region29
  $region28: #{tpu_custom_call.1} parent=0 // pred_region
    _
  $region29: #{tpu_custom_call.1} parent=0 // pred_fallthru
    _
  // Predicated region
  $region30: #{tpu_custom_call.1} parent=0 // pred_check
    _
  $region31: #{tpu_custom_call.1} parent=0 // pred_check_branch
    %30 = sbr.rel (0) target = $region33
  $region32: #{tpu_custom_call.1} parent=0 // pred_region
    _
  $region33: #{tpu_custom_call.1} parent=0 // pred_fallthru
    _
  // Predicated region
  $region34: #{tpu_custom_call.1} parent=0 // pred_check
    _
  $region35: #{tpu_custom_call.1} parent=0 // pred_check_branch
    %32 = sbr.rel (0) target = $region37
  $region36: #{tpu_custom_call.1} parent=0 // pred_region
    _
  $region37: #{tpu_custom_call.1} parent=0 // pred_fallthru
    _
  // Predicated region
  $region38: #{tpu_custom_call.1} parent=0 // pred_check
    _
  $region39: #{tpu_custom_call.1} parent=0 // pred_check_branch
    %34 = sbr.rel (0) target = $region41
  $region40: #{tpu_custom_call.1} parent=0 // pred_region
    _
  $region41: #{tpu_custom_call.1} parent=0 // pred_fallthru
    _
  %v35 = vld [vmem:[%s0] sm:$0xff]
  %v36 = vld [vmem:[%s0 + $0x8] sm:$0xff]
  %v37 = vld [vmem:[%s1] sm:$0xff]
  %v38 = vld [vmem:[%s1 + $0x8] sm:$0xff]
  %v39 = vadd.f32 %v35, %v37
  %v40 = vadd.f32 %v36, %v38
  %v41 = vld [vmem:[%s2] sm:$0xff]
  %v42 = vadd.f32 %v39, %v41
  %v43 = vadd.f32 %v40, %v41
  %vm44 = vcmask 261120
  %v45 = vsel %vm44, %v42, 0.0
  %46 = vadd.xlane.f32.xlu0 %v45
  %v47 = vpop.xlane.xlu0 %46
  %v48 = vsel %vm44, %v43, 0.0
  %49 = vadd.xlane.f32.xlu0 %v48
  %v50 = vpop.xlane.xlu0 %49
  %v51 = vrcp.pop 32.0
  %v52 = vmul.f32 32.0, %v51
  %v53 = vsub.f32 1.0, %v52
  %v54 = vmul.f32 %v51, %v53
  %v55 = vadd.f32 %v51, %v54
  %vm56 = vweird.f32 %v51
  %v57 = vsel %vm56, %v51, %v55
  %v58 = vmul.f32 %v47, %v57
  %v59 = vmul.f32 %v50, %v57
  %v60 = vmul.f32 %v42, %v42
  %v61 = vmul.f32 %v43, %v43
  %v62 = vsel %vm44, %v60, 0.0
  %63 = vadd.xlane.f32.xlu0 %v62
  %v64 = vpop.xlane.xlu0 %63
  %v65 = vsel %vm44, %v61, 0.0
  %66 = vadd.xlane.f32.xlu0 %v65
  %v67 = vpop.xlane.xlu0 %66
  %v68 = vmul.f32 %v64, %v57
  %v69 = vmul.f32 %v67, %v57
  %v70 = vmul.f32 %v58, %v58
  %v71 = vmul.f32 %v59, %v59
  %v72 = vsub.f32 %v68, %v70
  %v73 = vsub.f32 %v69, %v71
  %v74 = vsub.f32 %v42, %v58
  %v75 = vsub.f32 %v43, %v59
  %v76 = vadd.f32 %v72, 1e-12
  %v77 = vadd.f32 %v73, 1e-12
  %v78 = vrsqrt.pop %v76
  %v79 = vmul.f32 %v78, %v76
  %v80 = vmul.f32 %v79, %v78
  %v81 = vmul.f32 0.5, %v80
  %v82 = vsub.f32 1.5, %v81
  %v83 = vmul.f32 %v78, %v82
  %vm84 = vweird.f32 %v76
  %vm85 = vweird.f32 %v78
  %vm86 = vmor %vm84, %vm85
  %v87 = vsel %vm86, %v78, %v83
  %v88 = vrsqrt.pop %v77
  %v89 = vmul.f32 %v88, %v77
  %v90 = vmul.f32 %v89, %v88
  %v91 = vmul.f32 0.5, %v90
  %v92 = vsub.f32 1.5, %v91
  %v93 = vmul.f32 %v88, %v92
  %vm94 = vweird.f32 %v77
  %vm95 = vweird.f32 %v88
  %vm96 = vmor %vm94, %vm95
  %v97 = vsel %vm96, %v88, %v93
  %v98 = vmul.f32 %v74, %v87
  %v99 = vmul.f32 %v75, %v97
  %v100 = vld [vmem:[%s3] sm:$0x1]
  %v102 = vperm.slane %v100, 0
  %v104 = vmul.f32 %v98, %v102
  %v105 = vmul.f32 %v99, %v102
  %v106 = vld [vmem:[%s4] sm:$0x1]
  %v108 = vperm.slane %v106, 0
  %v110 = vadd.f32 %v104, %v108
  %v111 = vadd.f32 %v105, %v108
  %v112 = vld [vmem:[%s5] sm:$0x1]
  %v114 = vperm.slane %v112, 0
  %v116 = vadd.f32 %v110, %v114
  %v117 = vadd.f32 %v111, %v114
  %118 = vst.msk [vmem:[%s10] sm:$0xff] %vm44, %v116
  %119 = vst.msk [vmem:[%s10 + $0x20] sm:$0xff] %vm44, %v117
  %v120 = vld [vmem:[%s6] sm:$0xff]
  %v121 = vld [vmem:[%s6 + $0x8] sm:$0xff]
  %v122 = vld [vmem:[%s6 + $0x10] sm:$0xff]
  %v123 = vld [vmem:[%s6 + $0x18] sm:$0xff]
  %v124 = vld [vmem:[%s7] sm:$0xff]
  %v125 = vld [vmem:[%s7 + $0x8] sm:$0xff]
  %v126 = vld [vmem:[%s7 + $0x10] sm:$0xff]
  %v127 = vld [vmem:[%s7 + $0x18] sm:$0xff]
  %v128 = vld [vmem:[%s7 + $0x20] sm:$0xff]
  %v129 = vld [vmem:[%s7 + $0x28] sm:$0xff]
  %v130 = vld [vmem:[%s7 + $0x30] sm:$0xff]
  %v131 = vld [vmem:[%s7 + $0x38] sm:$0xff]
  %vm132 = vcmask 523264
  %v134 = vsel %vm132, %v120, 0
  %v137 = vsel %vm132, %v121, 0
  %v140 = vsel %vm132, %v122, 0
  %v143 = vsel %vm132, %v123, 0
  %145 = vmatpush.msra.mxu0 0.0
  %146 = vmatpush.msra.mxu0 0.0
  %147 = vmatpush.msra.mxu0 0.0
  %148 = vmatpush.msra.mxu0 0.0
  %149 = vmatpush.msra.mxu0 0.0
  %150 = vmatpush.msra.mxu0 0.0
  %151 = vmatpush.msra.mxu0 0.0
  %152 = vmatpush.msra.mxu0 0.0
  %153 = vmatpush.msra.mxu0 %v131
  %154 = vmatpush.msra.mxu0 %v130
  %155 = vmatpush.msra.mxu0 %v129
  %156 = vmatpush.msra.mxu0 %v128
  %157 = vmatpush.msra.mxu0 %v127
  %158 = vmatpush.msra.mxu0 %v126
  %159 = vmatpush.msra.mxu0 %v125
  %160 = vmatpush.msra.mxu0 %v124
  %161 = vmatmul.f32.gmra.mxu0 %v134
  %v162 = vpop.f32.mrf.mxu0
  %v163 = vadd.f32 0.0, %v162
  %164 = vmatmul.f32.gmra.mxu0 %v137
  %v165 = vpop.f32.mrf.mxu0
  %v166 = vadd.f32 0.0, %v165
  %167 = vmatmul.f32.gmra.mxu0 %v140
  %v168 = vpop.f32.mrf.mxu0
  %v169 = vadd.f32 0.0, %v168
  %170 = vmatmul.f32.gmra.mxu0 %v143
  %v171 = vpop.f32.mrf.mxu0
  %v172 = vadd.f32 0.0, %v171
  %173 = vdwg.mxu0
  %v174 = vld [vmem:[%s8] sm:$0x1]
  %vm175 = vcmask 253952
  %176 = vst.msk [vmem:[%s10 + $0x8] sm:$0x1] %vm175, %v174
  %177 = vst.msk [vmem:[%s10 + $0x28] sm:$0x1] %vm175, %v174
  %v178 = vld [vmem:[%s9] sm:$0xff]
  %v179 = vld [vmem:[%s9 + $0x8] sm:$0xff]
  %v180 = vadd.f32 %v163, %v178
  %v181 = vadd.f32 %v166, %v179
  %v182 = vadd.f32 %v169, %v178
  %v183 = vadd.f32 %v172, %v179
  %184 = vst.msk [vmem:[%s10 + $0x9] sm:$0xff] %vm44, %v180
  %185 = vst.msk [vmem:[%s10 + $0x11] sm:$0xff] %vm44, %v181
  %186 = vst.msk [vmem:[%s10 + $0x29] sm:$0xff] %vm44, %v182
  %187 = vst.msk [vmem:[%s10 + $0x31] sm:$0xff] %vm44, %v183
  // Predicated region
  $region42: #{tpu_custom_call.1} parent=0 // pred_check
    _
  $region43: #{tpu_custom_call.1} parent=0 // pred_check_branch
    %189 = sbr.rel (0) target = $region45
  $region44: #{tpu_custom_call.1} parent=0 // pred_region
    _
  $region45: #{tpu_custom_call.1} parent=0 // pred_fallthru
    _
  // Predicated region
  $region46: #{tpu_custom_call.1} parent=0 // pred_check
    _
  $region47: #{tpu_custom_call.1} parent=0 // pred_check_branch
    %191 = sbr.rel (0) target = $region49
  $region48: #{tpu_custom_call.1} parent=0 // pred_region
    _
  $region49: #{tpu_custom_call.1} parent=0 // pred_fallthru
    _

</llo_original>
